<compile_context>
chip_gen: v7x
topology: tpu7x:2x2x1
jax: 0.10.0
libtpu: 0.0.40
codegen_flags: <defaults>
</compile_context>

<pallas_src>
import functools

import jax
import jax.numpy as jnp
from jax.experimental import pallas as pl
from jax.experimental.pallas import tpu as pltpu


def _additive_attention_kernel(s_ref, h_ref, ws_ref, wh_ref, v_ref, o_ref,
                               m_sc, l_sc, *, block_n, n_valid):
    i = pl.program_id(0)
    nt = pl.num_programs(0)

    @pl.when(i == 0)
    def _init():
        m_sc[...] = jnp.full_like(m_sc, -jnp.inf)
        l_sc[...] = jnp.zeros_like(l_sc)

    # X = tanh(s @ W_s^T + h @ W_h^T): two MXU dots, f32 accumulate (no concat copy).
    acc = jnp.dot(s_ref[...], ws_ref[...], preferred_element_type=jnp.float32)
    acc = acc + jnp.dot(h_ref[...], wh_ref[...], preferred_element_type=jnp.float32)
    x = jnp.tanh(acc)                                              # (block_n, 2*d_attn) f32

    # v-projection: VPU broadcast-multiply + lane reduction (not an M=1 matmul).
    scores = jnp.sum(x * v_ref[...], axis=1, keepdims=True)        # (block_n, 1) f32

    # Mask rows past the true N (partial last tile) so they never affect the softmax.
    row = i * block_n + jax.lax.broadcasted_iota(jnp.int32, scores.shape, 0)
    scores = jnp.where(row < n_valid, scores, -jnp.inf)

    # Online softmax statistics.
    m_prev = m_sc[...]
    m_new = jnp.maximum(m_prev, jnp.max(scores, axis=0, keepdims=True))      # (1,1)
    alpha = jnp.exp(m_prev - m_new)
    l_new = l_sc[...] * alpha + jnp.sum(jnp.exp(scores - m_new), axis=0, keepdims=True)
    m_sc[...] = m_new
    l_sc[...] = l_new

    # Stash raw scores in the VMEM-resident output column.
    start = pl.multiple_of(i * block_n, block_n)
    o_ref[pl.ds(start, block_n), :] = scores

    # Finalize: normalize the whole resident column (VMEM-only pass, ~4*N bytes).
    @pl.when(i == nt - 1)
    def _finalize():
        o_ref[...] = jnp.exp(o_ref[...] - m_new) / l_new


def additive_attention(s, h, w, v, *, block_n=4096, compute_dtype=jnp.float32):
    """s, h: (N, d). w: (2*d_attn, 2*d). v: (1, 2*d_attn). Returns (1, N) float32."""
    n, d = s.shape
    two_da, two_d = w.shape
    assert two_d == 2 * d and v.shape == (1, two_da)

    # Split the fused weight and pre-transpose it (tiny one-time glue); this removes
    # both the in-kernel concatenate and any transpose of the big (N, d) activations.
    ws = jnp.transpose(w[:, :d]).astype(compute_dtype)      # (d, 2*d_attn)
    wh = jnp.transpose(w[:, d:]).astype(compute_dtype)      # (d, 2*d_attn)
    v32 = v.astype(jnp.float32)                             # keep the VPU reduce in f32

    s_c = s.astype(compute_dtype)
    h_c = h.astype(compute_dtype)

    if n <= block_n:
        tn, nt = n, 1            # single tile: block == full array (always legal)
    else:
        tn = block_n             # multiple of 8 (and 128) by construction
        nt = pl.cdiv(n, tn)
    n_pad = nt * tn

    kernel = functools.partial(_additive_attention_kernel, block_n=tn, n_valid=n)

    out_col = pl.pallas_call(
        kernel,
        out_shape=jax.ShapeDtypeStruct((n_pad, 1), jnp.float32),
        grid=(nt,),
        in_specs=[
            pl.BlockSpec((tn, d), lambda i: (i, 0)),        # s tile   (streamed)
            pl.BlockSpec((tn, d), lambda i: (i, 0)),        # h tile   (streamed)
            pl.BlockSpec((d, two_da), lambda i: (0, 0)),    # W_s^T    (resident)
            pl.BlockSpec((d, two_da), lambda i: (0, 0)),    # W_h^T    (resident)
            pl.BlockSpec((1, two_da), lambda i: (0, 0)),    # v        (resident)
        ],
        # Output stays resident in VMEM across the whole grid (accumulator pattern);
        # it is written back to HBM exactly once, after the final normalization.
        # (For extremely large N raise pltpu.CompilerParams(vmem_limit_bytes=...).)
        out_specs=pl.BlockSpec((n_pad, 1), lambda i: (0, 0)),
        scratch_shapes=[
            pltpu.VMEM((1, 1), jnp.float32),    # running max
            pltpu.VMEM((1, 1), jnp.float32),    # running sum
        ],
        compiler_params=pltpu.CompilerParams(
            # Softmax couples all N-tiles -> the single grid axis is a reduction axis.
            dimension_semantics=("arbitrary",)),
    )(s_c, h_c, ws, wh, v32)

    # (n_pad, 1) column -> (1, N) row: 4*N bytes of glue, negligible vs input traffic.
    return jnp.transpose(out_col[:n, :])


def _reference(s, h, w, v):
    x = jnp.concatenate([s, h], axis=1)               # (N, 2d)
    xw = jnp.tanh(x @ w.T)                            # (N, 2*d_attn)
    pre = (xw @ v.T).T                                # (1, N)
    return jax.nn.softmax(pre, axis=1)


if __name__ == "__main__":
    key = jax.random.PRNGKey(0)

    # Small shapes consistent with the module: N items of feature length d.
    n, d, d_attn = 8, 16, 32
    k_s, k_h, k_w, k_v = jax.random.split(key, 4)
    s = jax.random.normal(k_s, (n, d), dtype=jnp.float32)
    h = jax.random.normal(k_h, (n, d), dtype=jnp.float32)
    w = jax.random.normal(k_w, (2 * d_attn, 2 * d), dtype=jnp.float32) * 0.1
    v = jax.random.normal(k_v, (1, 2 * d_attn), dtype=jnp.float32) * 0.1

    out = jax.block_until_ready(additive_attention(s, h, w, v))
    ref = _reference(s, h, w, v)
    assert out.shape == (1, n)
    assert jnp.allclose(out, ref, atol=1e-5, rtol=1e-5), (out, ref)

    # Larger case: exercises the tiled grid, the online softmax, the masked partial
    # last tile (N not a multiple of block_n), and the bf16 MXU-operand path.
    n2 = 3000
    k_s2, k_h2 = jax.random.split(jax.random.PRNGKey(1), 2)
    s2 = jax.random.normal(k_s2, (n2, d), dtype=jnp.float32)
    h2 = jax.random.normal(k_h2, (n2, d), dtype=jnp.float32)

    out2 = jax.block_until_ready(additive_attention(s2, h2, w, v, block_n=1024))
    ref2 = _reference(s2, h2, w, v)
    assert out2.shape == (1, n2)
    assert jnp.allclose(out2, ref2, atol=1e-6, rtol=1e-4)

    out3 = jax.block_until_ready(
        additive_attention(s2, h2, w, v, block_n=1024, compute_dtype=jnp.bfloat16))
    assert out3.shape == (1, n2)
    assert float(jnp.max(jnp.abs(out3 - ref2))) < 1e-3

    print("KERNEL_OK")
</pallas_src>

<mosaic_0001>
module attributes {stable_mosaic.version = 11 : i64} {
  func.func @_additive_attention_kernel(%arg0: i32, %arg1: memref<8x16xf32, #tpu.memory_space<vmem>>, %arg2: memref<8x16xf32, #tpu.memory_space<vmem>>, %arg3: memref<16x64xf32, #tpu.memory_space<vmem>>, %arg4: memref<16x64xf32, #tpu.memory_space<vmem>>, %arg5: memref<1x64xf32, #tpu.memory_space<vmem>>, %arg6: memref<8x1xf32, #tpu.memory_space<vmem>>, %arg7: memref<1x1xf32, #tpu.memory_space<vmem>>, %arg8: memref<1x1xf32, #tpu.memory_space<vmem>>) attributes {dimension_semantics = [#tpu.dimension_semantics<arbitrary>], iteration_bounds = array<i64: 1>, scalar_prefetch = 0 : i64, scratch_operands = 2 : i64, tpu.core_type = #tpu.core_type<tc>, window_params = [{transform_indices = @transform_0, window_bounds = array<i64: 8, 16>}, {transform_indices = @transform_1, window_bounds = array<i64: 8, 16>}, {pipeline_mode = #tpu.pipeline_mode<synchronous>, transform_indices = @transform_2, window_bounds = array<i64: 16, 64>}, {pipeline_mode = #tpu.pipeline_mode<synchronous>, transform_indices = @transform_3, window_bounds = array<i64: 16, 64>}, {pipeline_mode = #tpu.pipeline_mode<synchronous>, transform_indices = @transform_4, window_bounds = array<i64: 1, 64>}, {pipeline_mode = #tpu.pipeline_mode<synchronous>, transform_indices = @transform_5, window_bounds = array<i64: 8, 1>}]} {
    %c0_i32 = arith.constant 0 : i32
    %0 = arith.cmpi eq, %arg0, %c0_i32 : i32
    %1 = arith.extui %0 : i1 to i32
    %c0_i32_0 = arith.constant 0 : i32
    %2 = arith.cmpi ne, %1, %c0_i32_0 : i32
    scf.if %2 {
      %cst_28 = arith.constant 0xFF800000 : f32
      %47 = vector.broadcast %cst_28 : f32 to vector<1x1xf32>
      %c0_29 = arith.constant 0 : index
      %c0_30 = arith.constant 0 : index
      %48 = vector.load %arg7[%c0_29, %c0_30] : memref<1x1xf32, #tpu.memory_space<vmem>>, vector<1x1xf32>
      tpu.vector_store %arg7[%c0_29, %c0_30], %47 {strides = array<i32>} : memref<1x1xf32, #tpu.memory_space<vmem>>, vector<1x1xf32>,
      %cst_31 = arith.constant 0.000000e+00 : f32
      %49 = vector.broadcast %cst_31 : f32 to vector<1x1xf32>
      %c0_32 = arith.constant 0 : index
      %c0_33 = arith.constant 0 : index
      %50 = vector.load %arg8[%c0_32, %c0_33] : memref<1x1xf32, #tpu.memory_space<vmem>>, vector<1x1xf32>
      tpu.vector_store %arg8[%c0_32, %c0_33], %49 {strides = array<i32>} : memref<1x1xf32, #tpu.memory_space<vmem>>, vector<1x1xf32>,
    } else {
    }
    %c0 = arith.constant 0 : index
    %c0_1 = arith.constant 0 : index
    %3 = vector.load %arg1[%c0, %c0_1] : memref<8x16xf32, #tpu.memory_space<vmem>>, vector<8x16xf32>
    %c0_2 = arith.constant 0 : index
    %c0_3 = arith.constant 0 : index
    %4 = vector.load %arg3[%c0_2, %c0_3] : memref<16x64xf32, #tpu.memory_space<vmem>>, vector<16x64xf32>
    %cst = arith.constant dense<0.000000e+00> : vector<8x64xf32>
    %5 = tpu.matmul %3, %4, %cst {dimension_numbers = #tpu.dot_dimension_numbers<[1], [0], [0], [1], [0, 0, 1, 1], [], []>} : vector<8x16xf32>, vector<16x64xf32>, vector<8x64xf32> -> vector<8x64xf32>
    %c0_4 = arith.constant 0 : index
    %c0_5 = arith.constant 0 : index
    %6 = vector.load %arg2[%c0_4, %c0_5] : memref<8x16xf32, #tpu.memory_space<vmem>>, vector<8x16xf32>
    %c0_6 = arith.constant 0 : index
    %c0_7 = arith.constant 0 : index
    %7 = vector.load %arg4[%c0_6, %c0_7] : memref<16x64xf32, #tpu.memory_space<vmem>>, vector<16x64xf32>
    %cst_8 = arith.constant dense<0.000000e+00> : vector<8x64xf32>
    %8 = tpu.matmul %6, %7, %cst_8 {dimension_numbers = #tpu.dot_dimension_numbers<[1], [0], [0], [1], [0, 0, 1, 1], [], []>} : vector<8x16xf32>, vector<16x64xf32>, vector<8x64xf32> -> vector<8x64xf32>
    %9 = arith.addf %5, %8 : vector<8x64xf32>
    %10 = math.tanh %9 : vector<8x64xf32>
    %c0_9 = arith.constant 0 : index
    %c0_10 = arith.constant 0 : index
    %11 = vector.load %arg5[%c0_9, %c0_10] : memref<1x64xf32, #tpu.memory_space<vmem>>, vector<1x64xf32>
    %12 = vector.broadcast %11 : vector<1x64xf32> to vector<8x64xf32>
    %13 = arith.mulf %10, %12 : vector<8x64xf32>
    %cst_11 = arith.constant dense<0.000000e+00> : vector<8xf32>
    %14 = vector.multi_reduction <add>, %13, %cst_11 [1] : vector<8x64xf32> to vector<8xf32>
    %15 = vector.shape_cast %14 : vector<8xf32> to vector<8x1xf32>
    %c8_i32 = arith.constant 8 : i32
    %16 = arith.muli %arg0, %c8_i32 : i32
    %17 = tpu.iota {dimensions = array<i32: 0>} : vector<8x1xi32>
    %18 = vector.broadcast %16 : i32 to vector<8x1xi32>
    %19 = arith.addi %18, %17 : vector<8x1xi32>
    %c8_i32_12 = arith.constant 8 : i32
    %20 = vector.broadcast %c8_i32_12 : i32 to vector<8x1xi32>
    %21 = arith.cmpi slt, %19, %20 : vector<8x1xi32>
    %cst_13 = arith.constant 0xFF800000 : f32
    %22 = vector.broadcast %cst_13 : f32 to vector<8x1xf32>
    %23 = arith.select %21, %15, %22 : vector<8x1xi1>, vector<8x1xf32>
    %c0_14 = arith.constant 0 : index
    %c0_15 = arith.constant 0 : index
    %24 = vector.load %arg7[%c0_14, %c0_15] : memref<1x1xf32, #tpu.memory_space<vmem>>, vector<1x1xf32>
    %cst_16 = arith.constant dense<0xFF800000> : vector<1xf32>
    %25 = vector.multi_reduction <maximumf>, %23, %cst_16 [0] : vector<8x1xf32> to vector<1xf32>
    %26 = vector.shape_cast %25 : vector<1xf32> to vector<1x1xf32>
    %27 = arith.maximumf %24, %26 : vector<1x1xf32>
    %28 = arith.subf %24, %27 : vector<1x1xf32>
    %29 = math.exp %28 : vector<1x1xf32>
    %c0_17 = arith.constant 0 : index
    %c0_18 = arith.constant 0 : index
    %30 = vector.load %arg8[%c0_17, %c0_18] : memref<1x1xf32, #tpu.memory_space<vmem>>, vector<1x1xf32>
    %31 = arith.mulf %30, %29 : vector<1x1xf32>
    %32 = vector.broadcast %27 : vector<1x1xf32> to vector<8x1xf32>
    %33 = arith.subf %23, %32 : vector<8x1xf32>
    %34 = math.exp %33 : vector<8x1xf32>
    %cst_19 = arith.constant dense<0.000000e+00> : vector<1xf32>
    %35 = vector.multi_reduction <add>, %34, %cst_19 [0] : vector<8x1xf32> to vector<1xf32>
    %36 = vector.shape_cast %35 : vector<1xf32> to vector<1x1xf32>
    %37 = arith.addf %31, %36 : vector<1x1xf32>
    %c0_20 = arith.constant 0 : index
    %c0_21 = arith.constant 0 : index
    %38 = vector.load %arg7[%c0_20, %c0_21] : memref<1x1xf32, #tpu.memory_space<vmem>>, vector<1x1xf32>
    tpu.vector_store %arg7[%c0_20, %c0_21], %27 {strides = array<i32>} : memref<1x1xf32, #tpu.memory_space<vmem>>, vector<1x1xf32>,
    %c0_22 = arith.constant 0 : index
    %c0_23 = arith.constant 0 : index
    %39 = vector.load %arg8[%c0_22, %c0_23] : memref<1x1xf32, #tpu.memory_space<vmem>>, vector<1x1xf32>
    tpu.vector_store %arg8[%c0_22, %c0_23], %37 {strides = array<i32>} : memref<1x1xf32, #tpu.memory_space<vmem>>, vector<1x1xf32>,
    %c8_i32_24 = arith.constant 8 : i32
    %40 = arith.muli %arg0, %c8_i32_24 : i32
    %41 = tpu.assume_multiple %40, 8 : i32
    %42 = arith.index_cast %41 : i32 to index
    %c0_25 = arith.constant 0 : index
    %43 = vector.load %arg6[%42, %c0_25] : memref<8x1xf32, #tpu.memory_space<vmem>>, vector<8x1xf32>
    tpu.vector_store %arg6[%42, %c0_25], %23 {strides = array<i32>} : memref<8x1xf32, #tpu.memory_space<vmem>>, vector<8x1xf32>,
    %c0_i32_26 = arith.constant 0 : i32
    %44 = arith.cmpi eq, %arg0, %c0_i32_26 : i32
    %45 = arith.extui %44 : i1 to i32
    %c0_i32_27 = arith.constant 0 : i32
    %46 = arith.cmpi ne, %45, %c0_i32_27 : i32
    scf.if %46 {
      %c0_28 = arith.constant 0 : index
      %c0_29 = arith.constant 0 : index
      %47 = vector.load %arg6[%c0_28, %c0_29] : memref<8x1xf32, #tpu.memory_space<vmem>>, vector<8x1xf32>
      %48 = vector.broadcast %27 : vector<1x1xf32> to vector<8x1xf32>
      %49 = arith.subf %47, %48 : vector<8x1xf32>
      %50 = math.exp %49 : vector<8x1xf32>
      %51 = vector.broadcast %37 : vector<1x1xf32> to vector<8x1xf32>
      %52 = arith.divf %50, %51 : vector<8x1xf32>
      %c0_30 = arith.constant 0 : index
      %c0_31 = arith.constant 0 : index
      %53 = vector.load %arg6[%c0_30, %c0_31] : memref<8x1xf32, #tpu.memory_space<vmem>>, vector<8x1xf32>
      tpu.vector_store %arg6[%c0_30, %c0_31], %52 {strides = array<i32>} : memref<8x1xf32, #tpu.memory_space<vmem>>, vector<8x1xf32>,
    } else {
    }
    return
  }
  func.func @transform_0(%arg0: i32) -> (i32, i32) {
    %c0_i32 = arith.constant 0 : i32
    %c0_i32_0 = arith.constant 0 : i32
    return %arg0, %c0_i32 : i32, i32
  }
  func.func @transform_1(%arg0: i32) -> (i32, i32) {
    %c0_i32 = arith.constant 0 : i32
    %c0_i32_0 = arith.constant 0 : i32
    return %arg0, %c0_i32 : i32, i32
  }
  func.func @transform_2(%arg0: i32) -> (i32, i32) {
    %c0_i32 = arith.constant 0 : i32
    %c0_i32_0 = arith.constant 0 : i32
    %c0_i32_1 = arith.constant 0 : i32
    return %c0_i32, %c0_i32_0 : i32, i32
  }
  func.func @transform_3(%arg0: i32) -> (i32, i32) {
    %c0_i32 = arith.constant 0 : i32
    %c0_i32_0 = arith.constant 0 : i32
    %c0_i32_1 = arith.constant 0 : i32
    return %c0_i32, %c0_i32_0 : i32, i32
  }
  func.func @transform_4(%arg0: i32) -> (i32, i32) {
    %c0_i32 = arith.constant 0 : i32
    %c0_i32_0 = arith.constant 0 : i32
    %c0_i32_1 = arith.constant 0 : i32
    return %c0_i32, %c0_i32_0 : i32, i32
  }
  func.func @transform_5(%arg0: i32) -> (i32, i32) {
    %c0_i32 = arith.constant 0 : i32
    %c0_i32_0 = arith.constant 0 : i32
    %c0_i32_1 = arith.constant 0 : i32
    return %c0_i32, %c0_i32_0 : i32, i32
  }
}

</mosaic_0001>

<llo_original>
// kernel: tpu_custom_call.1
$region0: #{tpu_custom_call.1}
  #allocation0 [shape = 'u32[]', space=smem, size = 0x4, offset = 0x4, fixed_abs, tag = 'smem constant byte address 0x4 - core index']
  #allocation1 [shape = 'u32[144,128]{1,0:T(1,128)}', space=vmem, size = 0x12000, scoped, tag = 'internal scratch']
  #allocation2 [shape = 'f32[1,1]{1,0:T(1,128)}', space=vmem, size = 0x200, scoped, tag = 'scratch operand']
  #allocation3 [shape = 'f32[1,1]{1,0:T(1,128)}', space=vmem, size = 0x200, scoped, tag = 'scratch operand']
  %s0 = inlined_call_operand.hbm [shape: f32[8,16], index: 0, kind: input, shape index: {}]
  %s1 = inlined_call_operand.hbm [shape: f32[8,16], index: 1, kind: input, shape index: {}]
  %s2 = inlined_call_operand.hbm [shape: f32[16,64], index: 2, kind: input, shape index: {}]
  %s3 = inlined_call_operand.hbm [shape: f32[16,64], index: 3, kind: input, shape index: {}]
  %s4 = inlined_call_operand.vmem [shape: f32[1,64], index: 4, kind: input, shape index: {}]
  %s5 = inlined_call_operand.vmem [shape: f32[8,1], index: 5, kind: output, shape index: {}]
  %s6 = sld [smem:[#allocation0]]
  $region54: #{tpu_custom_call.1} parent=0
    _
  %s8 = ssub.s32 1, %s6
  %s9 = scalar_select 0, %s8, %s6
  $region1: #{tpu_custom_call.1} parent=0
    #allocation4 [shape = 'u8[4096]{0}', space=vmem, size = 0x1000, scoped, tag = 'input window, operand 0, single buffered']
    #allocation5 [shape = 's32[1]{0}', space=sflag, size = 0x4, scoped, tag = 'scoped memory for tpu_custom_call.1']
    #allocation6 [shape = 'u8[4096]{0}', space=vmem, size = 0x1000, scoped, tag = 'input window, operand 1, single buffered']
    #allocation7 [shape = 's32[1]{0}', space=sflag, size = 0x4, scoped, tag = 'scoped memory for tpu_custom_call.1']
    #allocation8 [shape = 'u8[8192]{0}', space=vmem, size = 0x2000, scoped, tag = 'input window, operand 2, single buffered']
    #allocation9 [shape = 'u8[8192]{0}', space=vmem, size = 0x2000, scoped, tag = 'input window, operand 3, single buffered']
    #allocation10 [shape = 's32[1]{0}', space=sflag, size = 0x4, scoped, tag = 'scoped memory for tpu_custom_call.1']
    %10 = vsyncpa [#allocation5], 0
    %11 = vsyncpa [#allocation7], 0
    %12 = vsyncpa [#allocation10], 0
    // Predicated region
    $region2: #{tpu_custom_call.1} parent=1 // pred_check
      _
    $region3: #{tpu_custom_call.1} parent=1 // pred_check_branch
      %14 = sbr.rel (0) target = $region5
    $region4: #{tpu_custom_call.1} parent=1 // pred_region
      %s16 = ssub.s32 128, 128
      %17 = vsyncadd [#allocation5], %s16
      %s19 = sshll.u32 [#allocation4], 4
      %s20 = int_to_ptr.vmem [resolvable:$true] %s19
      %22 = dma.hbm_to_vmem [thread:$0]  %s0, 128, %s20, [#allocation5]
    $region5: #{tpu_custom_call.1} parent=1 // pred_fallthru
      _
    // Predicated region
    $region6: #{tpu_custom_call.1} parent=1 // pred_check
      _
    $region7: #{tpu_custom_call.1} parent=1 // pred_check_branch
      %24 = sbr.rel (0) target = $region9
    $region8: #{tpu_custom_call.1} parent=1 // pred_region
      %s26 = ssub.s32 128, 128
      %27 = vsyncadd [#allocation7], %s26
      %s29 = sshll.u32 [#allocation6], 4
      %s30 = int_to_ptr.vmem [resolvable:$true] %s29
      %32 = dma.hbm_to_vmem [thread:$0]  %s1, 128, %s30, [#allocation7]
    $region9: #{tpu_custom_call.1} parent=1 // pred_fallthru
      _
    // Predicated region
    $region10: #{tpu_custom_call.1} parent=1 // pred_check
      _
    $region11: #{tpu_custom_call.1} parent=1 // pred_check_branch
      %34 = sbr.rel (0) target = $region13
    $region12: #{tpu_custom_call.1} parent=1 // pred_region
      %s36 = ssub.s32 256, 256
      %37 = vsyncadd [#allocation7], %s36
      %s38 = sshll.u32 [#allocation8], 4
      %s39 = int_to_ptr.vmem [resolvable:$true] %s38
      %44 = dma.hbm_to_vmem [thread:$0]  %s2, 256, %s39, [#allocation7], 128, 128, 8
    $region13: #{tpu_custom_call.1} parent=1 // pred_fallthru
      _
    // Predicated region
    $region14: #{tpu_custom_call.1} parent=1 // pred_check
      _
    $region15: #{tpu_custom_call.1} parent=1 // pred_check_branch
      %46 = sbr.rel (0) target = $region17
    $region16: #{tpu_custom_call.1} parent=1 // pred_region
      %s48 = ssub.s32 256, 256
      %49 = vsyncadd [#allocation10], %s48
      %s50 = sshll.u32 [#allocation9], 4
      %s51 = int_to_ptr.vmem [resolvable:$true] %s50
      %56 = dma.hbm_to_vmem [thread:$0]  %s3, 256, %s51, [#allocation10], 128, 128, 8
    $region17: #{tpu_custom_call.1} parent=1 // pred_fallthru
      _
    // Predicated region
    $region18: #{tpu_custom_call.1} parent=1 // pred_check
      _
    $region19: #{tpu_custom_call.1} parent=1 // pred_check_branch
      %58 = sbr.rel (0) target = $region21
    $region20: #{tpu_custom_call.1} parent=1 // pred_region
      _
    $region21: #{tpu_custom_call.1} parent=1 // pred_fallthru
      _
    // Predicated region
    $region22: #{tpu_custom_call.1} parent=1 // pred_check
      _
    $region23: #{tpu_custom_call.1} parent=1 // pred_check_branch
      %60 = sbr.rel (0) target = $region25
    $region24: #{tpu_custom_call.1} parent=1 // pred_region
      %61 = dma.done [#allocation5], 128
    $region25: #{tpu_custom_call.1} parent=1 // pred_fallthru
      _
    // Predicated region
    $region26: #{tpu_custom_call.1} parent=1 // pred_check
      _
    $region27: #{tpu_custom_call.1} parent=1 // pred_check_branch
      %63 = sbr.rel (0) target = $region29
    $region28: #{tpu_custom_call.1} parent=1 // pred_region
      %64 = dma.done [#allocation7], 128
    $region29: #{tpu_custom_call.1} parent=1 // pred_fallthru
      _
    // Predicated region
    $region30: #{tpu_custom_call.1} parent=1 // pred_check
      _
    $region31: #{tpu_custom_call.1} parent=1 // pred_check_branch
      %66 = sbr.rel (0) target = $region33
    $region32: #{tpu_custom_call.1} parent=1 // pred_region
      %67 = dma.done [#allocation7], 256
    $region33: #{tpu_custom_call.1} parent=1 // pred_fallthru
      _
    // Predicated region
    $region34: #{tpu_custom_call.1} parent=1 // pred_check
      _
    $region35: #{tpu_custom_call.1} parent=1 // pred_check_branch
      %69 = sbr.rel (0) target = $region37
    $region36: #{tpu_custom_call.1} parent=1 // pred_region
      %70 = dma.done [#allocation10], 256
    $region37: #{tpu_custom_call.1} parent=1 // pred_fallthru
      _
    %p71 = scmp.eq.s32.totalorder 0, 0
    // Predicated region
    $region38: #{tpu_custom_call.1} parent=1 // pred_check
      %p72 = pneg %p71
    $region39: #{tpu_custom_call.1} parent=1 // pred_check_branch
      %74 = sbr.rel (%p72) target = $region41
    $region40: #{tpu_custom_call.1} parent=1 // pred_region
      %vm75 = vcmask 0
      %76 = vst.msk [vmem:[#allocation2] sm:$0x1] %vm75, -inf
      %77 = vst.msk [vmem:[#allocation3] sm:$0x1] %vm75, 0.0
    $region41: #{tpu_custom_call.1} parent=1 // pred_fallthru
      _
    %v78 = vld [vmem:[#allocation4] sm:$0xff]
    %v79 = vld [vmem:[#allocation8] sm:$0xff]
    %v80 = vld [vmem:[#allocation8 + $0x8] sm:$0xff]
    %v81 = vld [vmem:[#allocation6] sm:$0xff]
    %v82 = vld [vmem:[#allocation9] sm:$0xff]
    %v83 = vld [vmem:[#allocation9 + $0x8] sm:$0xff]
    %vm84 = vcmask 130048
    %v86 = vsel %vm84, %v81, 0
    %88 = vmatprep.subr.mxu0 0.0
    %89 = vmatpush1.msra.mxu0 %v82
    %90 = vmatprep.subr.mxu0 0.0
    %91 = vmatpush1.msra.mxu0 %v83
    %92 = vmatprep.subr.mxu0 0.0
    %93 = vmatpush1.msra.mxu0 0.0
    %94 = vmatprep.subr.mxu0 0.0
    %95 = vmatpush1.msra.mxu0 0.0
    %96 = vmatprep.subr.mxu0 0.0
    %97 = vmatpush1.msra.mxu0 0.0
    %98 = vmatprep.subr.mxu0 0.0
    %99 = vmatpush1.msra.mxu0 0.0
    %100 = vmatprep.subr.mxu0 0.0
    %101 = vmatpush1.msra.mxu0 0.0
    %102 = vmatprep.subr.mxu0 0.0
    %103 = vmatpush1.msra.mxu0 0.0
    %104 = vmatprep.subr.mxu0 0.0
    %105 = vmatpush1.msra.mxu0 0.0
    %106 = vmatprep.subr.mxu0 0.0
    %107 = vmatpush1.msra.mxu0 0.0
    %108 = vmatprep.subr.mxu0 0.0
    %109 = vmatpush1.msra.mxu0 0.0
    %110 = vmatprep.subr.mxu0 0.0
    %111 = vmatpush1.msra.mxu0 0.0
    %112 = vmatprep.subr.mxu0 0.0
    %113 = vmatpush1.msra.mxu0 0.0
    %114 = vmatprep.subr.mxu0 0.0
    %115 = vmatpush1.msra.mxu0 0.0
    %116 = vmatprep.subr.mxu0 0.0
    %117 = vmatpush1.msra.mxu0 0.0
    %118 = vmatprep.subr.mxu0 0.0
    %119 = vmatpush1.msra.mxu0 0.0
    %120 = vmatprep.subr.mxu0 0.0
    %121 = vmatpush1.msra.mxu0 0.0
    %122 = vmatprep.subr.mxu0 0.0
    %123 = vmatpush1.msra.mxu0 0.0
    %124 = vmatprep.subr.mxu0 0.0
    %125 = vmatpush1.msra.mxu0 0.0
    %126 = vmatprep.subr.mxu0 0.0
    %127 = vmatpush1.msra.mxu0 0.0
    %128 = vmatprep.subr.mxu0 0.0
    %129 = vmatpush1.msra.mxu0 0.0
    %130 = vmatprep.subr.mxu0 0.0
    %131 = vmatpush1.msra.mxu0 0.0
    %132 = vmatprep.subr.mxu0 0.0
    %133 = vmatpush1.msra.mxu0 0.0
    %134 = vmatprep.subr.mxu0 0.0
    %135 = vmatpush1.msra.mxu0 0.0
    %136 = vmatprep.subr.mxu0 0.0
    %137 = vmatpush1.msra.mxu0 0.0
    %138 = vmatprep.subr.mxu0 0.0
    %139 = vmatpush1.msra.mxu0 0.0
    %140 = vmatprep.subr.mxu0 0.0
    %141 = vmatpush1.msra.mxu0 0.0
    %142 = vmatprep.subr.mxu0 0.0
    %143 = vmatpush1.msra.mxu0 0.0
    %144 = vmatprep.subr.mxu0 0.0
    %145 = vmatpush1.msra.mxu0 0.0
    %146 = vmatprep.subr.mxu0 0.0
    %147 = vmatpush1.msra.mxu0 0.0
    %148 = vmatprep.subr.mxu0 0.0
    %149 = vmatpush1.msra.mxu0 0.0
    %150 = vmatprep.subr.mxu0 0.0
    %151 = vmatpush1.msra.mxu0 0.0
    %152 = vmatprep.mubr.f32.mxu0 0.0
    %153 = vmatmul.mubr.f32.gmra.mrb[0].mxu0 %v86
    %v154 = vpop.f32.mrb[0].mxu0
    %v155 = vadd.f32 0.0, %v154
    %v156 = vpop.f32.mrb[0].mxu0
    %157 = vdwg.mxu0
    %v159 = vsel %vm84, %v78, 0
    %161 = vmatprep.subr.mxu0 0.0
    %162 = vmatpush1.msra.mxu0 %v79
    %163 = vmatprep.subr.mxu0 0.0
    %164 = vmatpush1.msra.mxu0 %v80
    %165 = vmatprep.subr.mxu0 0.0
    %166 = vmatpush1.msra.mxu0 0.0
    %167 = vmatprep.subr.mxu0 0.0
    %168 = vmatpush1.msra.mxu0 0.0
    %169 = vmatprep.subr.mxu0 0.0
    %170 = vmatpush1.msra.mxu0 0.0
    %171 = vmatprep.subr.mxu0 0.0
    %172 = vmatpush1.msra.mxu0 0.0
    %173 = vmatprep.subr.mxu0 0.0
    %174 = vmatpush1.msra.mxu0 0.0
    %175 = vmatprep.subr.mxu0 0.0
    %176 = vmatpush1.msra.mxu0 0.0
    %177 = vmatprep.subr.mxu0 0.0
    %178 = vmatpush1.msra.mxu0 0.0
    %179 = vmatprep.subr.mxu0 0.0
    %180 = vmatpush1.msra.mxu0 0.0
    %181 = vmatprep.subr.mxu0 0.0
    %182 = vmatpush1.msra.mxu0 0.0
    %183 = vmatprep.subr.mxu0 0.0
    %184 = vmatpush1.msra.mxu0 0.0
    %185 = vmatprep.subr.mxu0 0.0
    %186 = vmatpush1.msra.mxu0 0.0
    %187 = vmatprep.subr.mxu0 0.0
    %188 = vmatpush1.msra.mxu0 0.0
    %189 = vmatprep.subr.mxu0 0.0
    %190 = vmatpush1.msra.mxu0 0.0
    %191 = vmatprep.subr.mxu0 0.0
    %192 = vmatpush1.msra.mxu0 0.0
    %193 = vmatprep.subr.mxu0 0.0
    %194 = vmatpush1.msra.mxu0 0.0
    %195 = vmatprep.subr.mxu0 0.0
    %196 = vmatpush1.msra.mxu0 0.0
    %197 = vmatprep.subr.mxu0 0.0
    %198 = vmatpush1.msra.mxu0 0.0
    %199 = vmatprep.subr.mxu0 0.0
    %200 = vmatpush1.msra.mxu0 0.0
    %201 = vmatprep.subr.mxu0 0.0
    %202 = vmatpush1.msra.mxu0 0.0
    %203 = vmatprep.subr.mxu0 0.0
    %204 = vmatpush1.msra.mxu0 0.0
    %205 = vmatprep.subr.mxu0 0.0
    %206 = vmatpush1.msra.mxu0 0.0
    %207 = vmatprep.subr.mxu0 0.0
    %208 = vmatpush1.msra.mxu0 0.0
    %209 = vmatprep.subr.mxu0 0.0
    %210 = vmatpush1.msra.mxu0 0.0
    %211 = vmatprep.subr.mxu0 0.0
    %212 = vmatpush1.msra.mxu0 0.0
    %213 = vmatprep.subr.mxu0 0.0
    %214 = vmatpush1.msra.mxu0 0.0
    %215 = vmatprep.subr.mxu0 0.0
    %216 = vmatpush1.msra.mxu0 0.0
    %217 = vmatprep.subr.mxu0 0.0
    %218 = vmatpush1.msra.mxu0 0.0
    %219 = vmatprep.subr.mxu0 0.0
    %220 = vmatpush1.msra.mxu0 0.0
    %221 = vmatprep.subr.mxu0 0.0
    %222 = vmatpush1.msra.mxu0 0.0
    %223 = vmatprep.subr.mxu0 0.0
    %224 = vmatpush1.msra.mxu0 0.0
    %225 = vmatprep.mubr.f32.mxu0 0.0
    %226 = vmatmul.mubr.f32.gmra.mrb[0].mxu0 %v159
    %v227 = vpop.f32.mrb[0].mxu0
    %v228 = vadd.f32 %v155, %v227
    %v229 = vpop.f32.mrb[0].mxu0
    %230 = vdwg.mxu0
    %v231 = vtanh.pop %v228
    %v232 = vld [vmem:[%s4] sm:$0x1]
    %v234 = vlaneseq
    %v235 = vshrl.u32 %v234, 7
    %v236 = vsub.s32 0, %v235
    %v237 = vrot.slane %v232, %v236
    %v239 = vmul.f32 %v231, %v237
    %vm240 = vcmask 523264
    %v241 = vsel %vm240, %v239, 0.0
    %242 = vadd.xlane.f32.xlu0 %v241
    %v243 = vpop.xlane.xlu0 %242
    %s244 = smul.u32 0, 8
    %v245 = vlaneseq
    %v246 = vshrl.u32 %v245, 7
    %v247 = vstv %s244
    %v248 = vadd.s32 %v247, %v246
    %vm249 = vcmp.lt.s32.totalorder %v248, 8
    %v250 = vsel %vm249, %v243, -inf
    %v251 = vld [vmem:[#allocation2] sm:$0x1]
    %v252 = vrot.slane %v250, 4
    %v253 = vmax.f32 %v250, %v252
    %v254 = vrot.slane %v253, 2
    %v255 = vmax.f32 %v253, %v254
    %v256 = vrot.slane %v255, 1
    %v257 = vmax.f32 %v255, %v256
    %v258 = vmax.f32 %v251, %v257
    %v259 = vsub.f32 %v251, %v258
    %v260 = vmul.f32 %v259, 1.442695
    %v261 = vpow.pop %v260
    %v262 = vld [vmem:[#allocation3] sm:$0x1]
    %v263 = vmul.f32 %v262, %v261
    %v265 = vlaneseq
    %v266 = vshrl.u32 %v265, 7
    %v267 = vsub.s32 0, %v266
    %v268 = vrot.slane %v258, %v267
    %v270 = vsub.f32 %v250, %v268
    %v271 = vmul.f32 %v270, 1.442695
    %v272 = vpow.pop %v271
    %vm273 = vcmask 7168
    %v274 = vsel %vm273, %v272, 0.0
    %v275 = vrot.slane %v274, 4
    %v276 = vadd.f32 %v274, %v275
    %v277 = vrot.slane %v276, 2
    %v278 = vadd.f32 %v276, %v277
    %v279 = vrot.slane %v278, 1
    %v280 = vadd.f32 %v278, %v279
    %v281 = vadd.f32 %v263, %v280
    %vm282 = vcmask 0
    %283 = vst.msk [vmem:[#allocation2] sm:$0x1] %vm282, %v258
    %284 = vst.msk [vmem:[#allocation3] sm:$0x1] %vm282, %v281
    %s285 = scalar_lea.vmem %s5, %s244
    %286 = vst.msk [vmem:[%s285] sm:$0xff] %vm273, %v250
    // Predicated region
    $region42: #{tpu_custom_call.1} parent=1 // pred_check
      %p287 = pneg %p71
    $region43: #{tpu_custom_call.1} parent=1 // pred_check_branch
      %289 = sbr.rel (%p287) target = $region45
    $region44: #{tpu_custom_call.1} parent=1 // pred_region
      %v290 = vld [vmem:[%s5] sm:$0xff]
      %v291 = vsub.f32 %v290, %v268
      %v292 = vmul.f32 %v291, 1.442695
      %v293 = vpow.pop %v292
      %v295 = vlaneseq
      %v296 = vshrl.u32 %v295, 7
      %v297 = vsub.s32 0, %v296
      %v298 = vrot.slane %v281, %v297
      %v300 = vrcp.pop %v298
      %v301 = vmul.f32 %v293, %v300
      %302 = vst.msk [vmem:[%s5] sm:$0xff] %vm273, %v301
    $region45: #{tpu_custom_call.1} parent=1 // pred_fallthru
      _
    // Predicated region
    $region46: #{tpu_custom_call.1} parent=1 // pred_check
      _
    $region47: #{tpu_custom_call.1} parent=1 // pred_check_branch
      %304 = sbr.rel (0) target = $region49
    $region48: #{tpu_custom_call.1} parent=1 // pred_region
      _
    $region49: #{tpu_custom_call.1} parent=1 // pred_fallthru
      _
    // Predicated region
    $region50: #{tpu_custom_call.1} parent=1 // pred_check
      _
    $region51: #{tpu_custom_call.1} parent=1 // pred_check_branch
      %306 = sbr.rel (0) target = $region53
    $region52: #{tpu_custom_call.1} parent=1 // pred_region
      _
    $region53: #{tpu_custom_call.1} parent=1 // pred_fallthru
      _
    %307 = vsyncpa [#allocation5], 1
    %308 = vsyncpa [#allocation7], 1
    %309 = vsyncpa [#allocation10], 1

</llo_original>
